<compile_context>
chip_gen: v7x
topology: tpu7x:2x2x1
jax: 0.10.0
libtpu: 0.0.40
codegen_flags: <defaults>
</compile_context>

<pallas_src>
import functools

import jax
import jax.numpy as jnp
from jax.experimental import pallas as pl
from jax.experimental.pallas import tpu as pltpu


def _neumf_kernel(layer_dims,
                  mf_u_ref, mf_i_ref, mlp_u_ref, mlp_i_ref,
                  w_slab_ref, f32_slab_ref, out_ref):
    """Fused NeuMF forward for one batch tile (batch on lanes).

    Shapes (tile_b = lane dim of this grid step):
      mf_u_ref, mf_i_ref   : (mf_dim, tile_b)  f32
      mlp_u_ref, mlp_i_ref : (half,   tile_b)  bf16
      w_slab_ref           : (n_slots * r_w, c_w) bf16   transposed MLP weights
                             slot 0 = W1[:half].T, slot 1 = W1[half:].T,
                             slot l = W_l.T for l >= 2
      f32_slab_ref         : (r_f, n_layers + 3) f32 columns:
                             [b_1 .. b_L | w_out_mlp | w_out_mf | b_out]
      out_ref              : (1, tile_b) f32
    """
    n_layers = len(layer_dims) - 1
    half = layer_dims[0] // 2
    h1 = layer_dims[1]
    h_last = layer_dims[-1]
    r_w = max(layer_dims[1:])
    mf_dim = mf_u_ref.shape[0]

    w_slab = w_slab_ref[...]
    f32_slab = f32_slab_ref[...]

    # ----- GMF branch: elementwise product of MF embeddings (f32, VPU) -----
    mf_vec = mf_u_ref[...] * mf_i_ref[...]                       # (mf_dim, tile_b)

    # ----- MLP branch (transposed: x is (features, tile_b)) -----
    # First layer split across the user/item concat boundary:
    #   (concat(u, i) @ W1)^T == W1[:half].T @ u^T + W1[half:].T @ i^T
    w1_u = w_slab[0:h1, 0:half]                                  # (h1, half) bf16
    w1_i = w_slab[r_w:r_w + h1, 0:half]                          # (h1, half) bf16
    b1 = f32_slab[0:h1, 0:1]                                     # (h1, 1)    f32
    x = (jnp.dot(w1_u, mlp_u_ref[...], preferred_element_type=jnp.float32)
         + jnp.dot(w1_i, mlp_i_ref[...], preferred_element_type=jnp.float32)
         + b1)
    x = jnp.maximum(x, 0.0)                                      # ReLU (f32)
    # Dropout(p=0.1): identity at inference time.
    # TODO(synk): training-mode dropout (pltpu.prng_random_bits mask) not implemented.

    for l in range(2, n_layers + 1):
        h_out, h_in = layer_dims[l], layer_dims[l - 1]
        w = w_slab[l * r_w:l * r_w + h_out, 0:h_in]              # (h_out, h_in) bf16
        b = f32_slab[0:h_out, l - 1:l]                           # (h_out, 1)    f32
        x = jnp.dot(w, x.astype(jnp.bfloat16),
                    preferred_element_type=jnp.float32) + b
        x = jnp.maximum(x, 0.0)

    # ----- Final N=1 projection: VPU multiply + sublane (XLU) reduction,
    # producing a lane-dense (1, tile_b) logit row -> unmasked full-lane store.
    w_out_mlp = f32_slab[0:h_last, n_layers:n_layers + 1]        # (h_last, 1)
    w_out_mf = f32_slab[0:mf_dim, n_layers + 1:n_layers + 2]     # (mf_dim, 1)
    b_out = f32_slab[0:1, n_layers + 2:n_layers + 3]             # (1, 1)
    logit = (jnp.sum(mf_vec * w_out_mf, axis=0, keepdims=True)
             + jnp.sum(x * w_out_mlp, axis=0, keepdims=True)
             + b_out)                                            # (1, tile_b)
    out_ref[...] = jax.nn.sigmoid(logit)


def _choose_tile_b(batch, tile_b_max):
    """Lane-dim tile: multiple of 128, as big as possible, but aim for >= 2
    grid steps so v7x's two TensorCores both get work."""
    half_b = -(-batch // 2)
    t = -(-half_b // 128) * 128
    return int(max(128, min(tile_b_max, t)))


def neumf_forward(user_input, item_input, params, *, tile_b_max=2048):
    """Runs the NeuMF forward pass. Returns predictions of shape (B,)."""
    mlp_ws = params["mlp_ws"]      # list of (in, out)
    mlp_bs = params["mlp_bs"]      # list of (1, out)
    n_layers = len(mlp_ws)
    mf_dim = params["mf_user_emb"].shape[1]
    half = params["mlp_user_emb"].shape[1]
    layer_dims = (2 * half,) + tuple(w.shape[1] for w in mlp_ws)
    h1, h_last = layer_dims[1], layer_dims[-1]

    B = user_input.shape[0]
    tile_b = _choose_tile_b(B, tile_b_max)
    n_tiles = -(-B // tile_b)
    b_pad = n_tiles * tile_b

    # Pad the index vectors (cheap) so gathered activations come out padded;
    # padded columns compute harmless values that are sliced off at the end.
    pad = b_pad - B
    u_idx = jnp.pad(user_input, (0, pad)) if pad else user_input
    i_idx = jnp.pad(item_input, (0, pad)) if pad else item_input

    # ---- glue: embedding gathers, emitted directly in the transposed
    # (features, batch) layout the kernel consumes ----
    # TODO(synk): fuse the gathers into the kernel for production-sized tables
    # (PrefetchScalarGridSpec scalar-prefetched index vectors + per-row DMA
    # from tables kept at memory_space=pl.ANY).
    mf_u_t = jnp.take(params["mf_user_emb"], u_idx, axis=0).T           # (mf_dim, b_pad) f32
    mf_i_t = jnp.take(params["mf_item_emb"], i_idx, axis=0).T
    mlp_u_t = jnp.take(params["mlp_user_emb"], u_idx, axis=0).T.astype(jnp.bfloat16)
    mlp_i_t = jnp.take(params["mlp_item_emb"], i_idx, axis=0).T.astype(jnp.bfloat16)

    # ---- pack parameters into two VMEM-resident constant slabs ----
    # bf16 weight slab: slot s occupies rows [s*r_w, s*r_w + out_dim).
    r_w = max(layer_dims[1:])
    c_w = max([half] + list(layer_dims[1:-1]))
    n_slots = n_layers + 1
    w1 = mlp_ws[0]
    w_slab = jnp.zeros((n_slots * r_w, c_w), jnp.bfloat16)
    w_slab = w_slab.at[0:h1, 0:half].set(w1[:half, :].T.astype(jnp.bfloat16))
    w_slab = w_slab.at[r_w:r_w + h1, 0:half].set(w1[half:, :].T.astype(jnp.bfloat16))
    for l in range(2, n_layers + 1):
        w_slab = w_slab.at[l * r_w:l * r_w + layer_dims[l], 0:layer_dims[l - 1]].set(
            mlp_ws[l - 1].T.astype(jnp.bfloat16))

    # f32 slab columns: [b_1 .. b_L | w_out_mlp | w_out_mf | b_out]
    r_f = max(max(layer_dims[1:]), mf_dim)
    f32_slab = jnp.zeros((r_f, n_layers + 3), jnp.float32)
    for l in range(1, n_layers + 1):
        f32_slab = f32_slab.at[0:layer_dims[l], l - 1].set(
            mlp_bs[l - 1].reshape(-1).astype(jnp.float32))
    f32_slab = f32_slab.at[0:h_last, n_layers].set(
        params["out_w_mlp"].reshape(-1).astype(jnp.float32))
    f32_slab = f32_slab.at[0:mf_dim, n_layers + 1].set(
        params["out_w_mf"].reshape(-1).astype(jnp.float32))
    f32_slab = f32_slab.at[0, n_layers + 2].set(
        params["out_b"].reshape(()).astype(jnp.float32))

    def act_spec(d):
        return pl.BlockSpec((d, tile_b), lambda i: (0, i))

    def const_spec(a):
        return pl.BlockSpec(a.shape, lambda i: (0,) * a.ndim)   # VMEM-resident

    out = pl.pallas_call(
        functools.partial(_neumf_kernel, layer_dims),
        out_shape=jax.ShapeDtypeStruct((1, b_pad), jnp.float32),
        grid=(n_tiles,),
        in_specs=[act_spec(mf_dim), act_spec(mf_dim),
                  act_spec(half), act_spec(half),
                  const_spec(w_slab), const_spec(f32_slab)],
        out_specs=pl.BlockSpec((1, tile_b), lambda i: (0, i)),
        compiler_params=pltpu.CompilerParams(
            dimension_semantics=("parallel",),
            vmem_limit_bytes=32 * 1024 * 1024),
    )(mf_u_t, mf_i_t, mlp_u_t, mlp_i_t, w_slab, f32_slab)
    return out[0, :B]


def init_params(key, num_users, num_items, mf_dim, mlp_layers):
    keys = jax.random.split(key, 16)
    ki = iter(keys)
    params = {
        "mf_user_emb": jax.random.normal(next(ki), (num_users, mf_dim), jnp.float32) * 0.05,
        "mf_item_emb": jax.random.normal(next(ki), (num_items, mf_dim), jnp.float32) * 0.05,
        "mlp_user_emb": jax.random.normal(next(ki), (num_users, mlp_layers[0] // 2), jnp.float32) * 0.05,
        "mlp_item_emb": jax.random.normal(next(ki), (num_items, mlp_layers[0] // 2), jnp.float32) * 0.05,
    }
    mlp_ws, mlp_bs = [], []
    for i in range(1, len(mlp_layers)):
        fan_in, fan_out = mlp_layers[i - 1], mlp_layers[i]
        bound = 1.0 / jnp.sqrt(fan_in)
        mlp_ws.append(jax.random.uniform(next(ki), (fan_in, fan_out), jnp.float32, -bound, bound))
        mlp_bs.append(jax.random.uniform(next(ki), (1, fan_out), jnp.float32, -bound, bound))
    params["mlp_ws"] = mlp_ws
    params["mlp_bs"] = mlp_bs

    fan_in = mf_dim + mlp_layers[-1]
    bound = 1.0 / jnp.sqrt(fan_in)
    out_w = jax.random.uniform(next(ki), (fan_in, 1), jnp.float32, -bound, bound)
    params["out_w_mf"] = out_w[:mf_dim]
    params["out_w_mlp"] = out_w[mf_dim:]
    params["out_b"] = jax.random.uniform(next(ki), (1, 1), jnp.float32, -bound, bound)
    return params


def neumf_reference(user_input, item_input, params):
    """Pure-JAX f32 reference mirroring the PyTorch forward (eval mode)."""
    mf_u = params["mf_user_emb"][user_input]
    mf_i = params["mf_item_emb"][item_input]
    mf_vec = mf_u * mf_i
    mlp_u = params["mlp_user_emb"][user_input]
    mlp_i = params["mlp_item_emb"][item_input]
    x = jnp.concatenate([mlp_u, mlp_i], axis=-1)
    for w, b in zip(params["mlp_ws"], params["mlp_bs"]):
        x = jnp.maximum(x @ w + b, 0.0)
    pred_vec = jnp.concatenate([mf_vec, x], axis=-1)
    out_w = jnp.concatenate([params["out_w_mf"], params["out_w_mlp"]], axis=0)
    logit = pred_vec @ out_w + params["out_b"]
    return jax.nn.sigmoid(logit).reshape(-1)


if __name__ == "__main__":
    num_users, num_items = 1000, 1500
    mf_dim = 8
    mlp_layers = [16, 32, 16, 8]
    batch = 300                      # tile_b=256 -> 2 lane-dense grid tiles

    key = jax.random.PRNGKey(0)
    k_params, k_u, k_i = jax.random.split(key, 3)
    params = init_params(k_params, num_users, num_items, mf_dim, mlp_layers)

    user_input = jax.random.randint(k_u, (batch,), 0, num_users, dtype=jnp.int32)
    item_input = jax.random.randint(k_i, (batch,), 0, num_items, dtype=jnp.int32)

    pred = neumf_forward(user_input, item_input, params)
    pred = jax.block_until_ready(pred)

    ref = neumf_reference(user_input, item_input, params)
    assert pred.shape == (batch,)
    # bf16 matmul operands -> loosen tolerance vs. the f32 reference.
    err = float(jnp.max(jnp.abs(pred - ref)))
    assert jnp.allclose(pred, ref, atol=1e-2, rtol=1e-2), (err, pred[:4], ref[:4])

    print("KERNEL_OK")
</pallas_src>

<mosaic_0001>
module attributes {stable_mosaic.version = 11 : i64} {
  func.func @_neumf_kernel(%arg0: i32, %arg1: memref<8x256xf32, #tpu.memory_space<vmem>>, %arg2: memref<8x256xf32, #tpu.memory_space<vmem>>, %arg3: memref<8x256xbf16, #tpu.memory_space<vmem>>, %arg4: memref<8x256xbf16, #tpu.memory_space<vmem>>, %arg5: memref<128x32xbf16, #tpu.memory_space<vmem>>, %arg6: memref<32x6xf32, #tpu.memory_space<vmem>>, %arg7: memref<1x256xf32, #tpu.memory_space<vmem>>) attributes {dimension_semantics = [#tpu.dimension_semantics<parallel>], iteration_bounds = array<i64: 2>, scalar_prefetch = 0 : i64, scratch_operands = 0 : i64, tpu.core_type = #tpu.core_type<tc>, window_params = [{transform_indices = @transform_0, window_bounds = array<i64: 8, 256>}, {transform_indices = @transform_1, window_bounds = array<i64: 8, 256>}, {transform_indices = @transform_2, window_bounds = array<i64: 8, 256>}, {transform_indices = @transform_3, window_bounds = array<i64: 8, 256>}, {pipeline_mode = #tpu.pipeline_mode<synchronous>, transform_indices = @transform_4, window_bounds = array<i64: 128, 32>}, {pipeline_mode = #tpu.pipeline_mode<synchronous>, transform_indices = @transform_5, window_bounds = array<i64: 32, 6>}, {transform_indices = @transform_6, window_bounds = array<i64: 1, 256>}]} {
    %c0 = arith.constant 0 : index
    %c0_0 = arith.constant 0 : index
    %0 = vector.load %arg5[%c0, %c0_0] : memref<128x32xbf16, #tpu.memory_space<vmem>>, vector<128x32xbf16>
    %c0_1 = arith.constant 0 : index
    %c0_2 = arith.constant 0 : index
    %1 = vector.load %arg6[%c0_1, %c0_2] : memref<32x6xf32, #tpu.memory_space<vmem>>, vector<32x6xf32>
    %c0_3 = arith.constant 0 : index
    %c0_4 = arith.constant 0 : index
    %2 = vector.load %arg1[%c0_3, %c0_4] : memref<8x256xf32, #tpu.memory_space<vmem>>, vector<8x256xf32>
    %c0_5 = arith.constant 0 : index
    %c0_6 = arith.constant 0 : index
    %3 = vector.load %arg2[%c0_5, %c0_6] : memref<8x256xf32, #tpu.memory_space<vmem>>, vector<8x256xf32>
    %4 = arith.mulf %2, %3 : vector<8x256xf32>
    %5 = vector.extract_strided_slice %0 {offsets = [0, 0], sizes = [32, 8], strides = [1, 1]} : vector<128x32xbf16> to vector<32x8xbf16>
    %6 = vector.extract_strided_slice %0 {offsets = [32, 0], sizes = [32, 8], strides = [1, 1]} : vector<128x32xbf16> to vector<32x8xbf16>
    %7 = vector.extract_strided_slice %1 {offsets = [0, 0], sizes = [32, 1], strides = [1, 1]} : vector<32x6xf32> to vector<32x1xf32>
    %c0_7 = arith.constant 0 : index
    %c0_8 = arith.constant 0 : index
    %8 = vector.load %arg3[%c0_7, %c0_8] : memref<8x256xbf16, #tpu.memory_space<vmem>>, vector<8x256xbf16>
    %cst = arith.constant dense<0.000000e+00> : vector<32x256xf32>
    %9 = tpu.matmul %5, %8, %cst {dimension_numbers = #tpu.dot_dimension_numbers<[1], [0], [0], [1], [0, 0, 1, 1], [], []>} : vector<32x8xbf16>, vector<8x256xbf16>, vector<32x256xf32> -> vector<32x256xf32>
    %c0_9 = arith.constant 0 : index
    %c0_10 = arith.constant 0 : index
    %10 = vector.load %arg4[%c0_9, %c0_10] : memref<8x256xbf16, #tpu.memory_space<vmem>>, vector<8x256xbf16>
    %cst_11 = arith.constant dense<0.000000e+00> : vector<32x256xf32>
    %11 = tpu.matmul %6, %10, %cst_11 {dimension_numbers = #tpu.dot_dimension_numbers<[1], [0], [0], [1], [0, 0, 1, 1], [], []>} : vector<32x8xbf16>, vector<8x256xbf16>, vector<32x256xf32> -> vector<32x256xf32>
    %12 = arith.addf %9, %11 : vector<32x256xf32>
    %13 = vector.broadcast %7 : vector<32x1xf32> to vector<32x256xf32>
    %14 = arith.addf %12, %13 : vector<32x256xf32>
    %cst_12 = arith.constant 0.000000e+00 : f32
    %15 = vector.broadcast %cst_12 : f32 to vector<32x256xf32>
    %16 = arith.maximumf %14, %15 : vector<32x256xf32>
    %17 = vector.extract_strided_slice %0 {offsets = [64, 0], sizes = [16, 32], strides = [1, 1]} : vector<128x32xbf16> to vector<16x32xbf16>
    %18 = vector.extract_strided_slice %1 {offsets = [0, 1], sizes = [16, 1], strides = [1, 1]} : vector<32x6xf32> to vector<16x1xf32>
    %19 = arith.truncf %16 : vector<32x256xf32> to vector<32x256xbf16>
    %cst_13 = arith.constant dense<0.000000e+00> : vector<16x256xf32>
    %20 = tpu.matmul %17, %19, %cst_13 {dimension_numbers = #tpu.dot_dimension_numbers<[1], [0], [0], [1], [0, 0, 1, 1], [], []>} : vector<16x32xbf16>, vector<32x256xbf16>, vector<16x256xf32> -> vector<16x256xf32>
    %21 = vector.broadcast %18 : vector<16x1xf32> to vector<16x256xf32>
    %22 = arith.addf %20, %21 : vector<16x256xf32>
    %cst_14 = arith.constant 0.000000e+00 : f32
    %23 = vector.broadcast %cst_14 : f32 to vector<16x256xf32>
    %24 = arith.maximumf %22, %23 : vector<16x256xf32>
    %25 = vector.extract_strided_slice %0 {offsets = [96, 0], sizes = [8, 16], strides = [1, 1]} : vector<128x32xbf16> to vector<8x16xbf16>
    %26 = vector.extract_strided_slice %1 {offsets = [0, 2], sizes = [8, 1], strides = [1, 1]} : vector<32x6xf32> to vector<8x1xf32>
    %27 = arith.truncf %24 : vector<16x256xf32> to vector<16x256xbf16>
    %cst_15 = arith.constant dense<0.000000e+00> : vector<8x256xf32>
    %28 = tpu.matmul %25, %27, %cst_15 {dimension_numbers = #tpu.dot_dimension_numbers<[1], [0], [0], [1], [0, 0, 1, 1], [], []>} : vector<8x16xbf16>, vector<16x256xbf16>, vector<8x256xf32> -> vector<8x256xf32>
    %29 = vector.broadcast %26 : vector<8x1xf32> to vector<8x256xf32>
    %30 = arith.addf %28, %29 : vector<8x256xf32>
    %cst_16 = arith.constant 0.000000e+00 : f32
    %31 = vector.broadcast %cst_16 : f32 to vector<8x256xf32>
    %32 = arith.maximumf %30, %31 : vector<8x256xf32>
    %33 = vector.extract_strided_slice %1 {offsets = [0, 3], sizes = [8, 1], strides = [1, 1]} : vector<32x6xf32> to vector<8x1xf32>
    %34 = vector.extract_strided_slice %1 {offsets = [0, 4], sizes = [8, 1], strides = [1, 1]} : vector<32x6xf32> to vector<8x1xf32>
    %35 = vector.extract_strided_slice %1 {offsets = [0, 5], sizes = [1, 1], strides = [1, 1]} : vector<32x6xf32> to vector<1x1xf32>
    %36 = vector.broadcast %34 : vector<8x1xf32> to vector<8x256xf32>
    %37 = arith.mulf %4, %36 : vector<8x256xf32>
    %cst_17 = arith.constant dense<0.000000e+00> : vector<256xf32>
    %38 = vector.multi_reduction <add>, %37, %cst_17 [0] : vector<8x256xf32> to vector<256xf32>
    %39 = vector.shape_cast %38 : vector<256xf32> to vector<1x256xf32>
    %40 = vector.broadcast %33 : vector<8x1xf32> to vector<8x256xf32>
    %41 = arith.mulf %32, %40 : vector<8x256xf32>
    %cst_18 = arith.constant dense<0.000000e+00> : vector<256xf32>
    %42 = vector.multi_reduction <add>, %41, %cst_18 [0] : vector<8x256xf32> to vector<256xf32>
    %43 = vector.shape_cast %42 : vector<256xf32> to vector<1x256xf32>
    %44 = arith.addf %39, %43 : vector<1x256xf32>
    %45 = vector.broadcast %35 : vector<1x1xf32> to vector<1x256xf32>
    %46 = arith.addf %44, %45 : vector<1x256xf32>
    %47 = arith.negf %46 : vector<1x256xf32>
    %48 = math.exp %47 : vector<1x256xf32>
    %cst_19 = arith.constant 1.000000e+00 : f32
    %49 = vector.broadcast %cst_19 : f32 to vector<1x256xf32>
    %50 = arith.addf %49, %48 : vector<1x256xf32>
    %51 = arith.divf %49, %50 : vector<1x256xf32>
    %c0_20 = arith.constant 0 : index
    %c0_21 = arith.constant 0 : index
    %52 = vector.load %arg7[%c0_20, %c0_21] : memref<1x256xf32, #tpu.memory_space<vmem>>, vector<1x256xf32>
    tpu.vector_store %arg7[%c0_20, %c0_21], %51 {strides = array<i32>} : memref<1x256xf32, #tpu.memory_space<vmem>>, vector<1x256xf32>,
    return
  }
  func.func @transform_0(%arg0: i32) -> (i32, i32) {
    %c0_i32 = arith.constant 0 : i32
    %c0_i32_0 = arith.constant 0 : i32
    return %c0_i32, %arg0 : i32, i32
  }
  func.func @transform_1(%arg0: i32) -> (i32, i32) {
    %c0_i32 = arith.constant 0 : i32
    %c0_i32_0 = arith.constant 0 : i32
    return %c0_i32, %arg0 : i32, i32
  }
  func.func @transform_2(%arg0: i32) -> (i32, i32) {
    %c0_i32 = arith.constant 0 : i32
    %c0_i32_0 = arith.constant 0 : i32
    return %c0_i32, %arg0 : i32, i32
  }
  func.func @transform_3(%arg0: i32) -> (i32, i32) {
    %c0_i32 = arith.constant 0 : i32
    %c0_i32_0 = arith.constant 0 : i32
    return %c0_i32, %arg0 : i32, i32
  }
  func.func @transform_4(%arg0: i32) -> (i32, i32) {
    %c0_i32 = arith.constant 0 : i32
    %c0_i32_0 = arith.constant 0 : i32
    %c0_i32_1 = arith.constant 0 : i32
    return %c0_i32, %c0_i32_0 : i32, i32
  }
  func.func @transform_5(%arg0: i32) -> (i32, i32) {
    %c0_i32 = arith.constant 0 : i32
    %c0_i32_0 = arith.constant 0 : i32
    %c0_i32_1 = arith.constant 0 : i32
    return %c0_i32, %c0_i32_0 : i32, i32
  }
  func.func @transform_6(%arg0: i32) -> (i32, i32) {
    %c0_i32 = arith.constant 0 : i32
    %c0_i32_0 = arith.constant 0 : i32
    return %c0_i32, %arg0 : i32, i32
  }
}

</mosaic_0001>

<llo_original>
// kernel: tpu_custom_call.1
$region0: #{tpu_custom_call.1}
  #allocation0 [shape = 'u32[]', space=smem, size = 0x4, offset = 0x4, fixed_abs, tag = 'smem constant byte address 0x4 - core index']
  #allocation1 [shape = 'u32[144,128]{1,0:T(1,128)}', space=vmem, size = 0x12000, scoped, tag = 'internal scratch']
  %s0 = inlined_call_operand.vmem [shape: f32[8,512], index: 0, kind: input, shape index: {}]
  %s1 = inlined_call_operand.vmem [shape: f32[8,512], index: 1, kind: input, shape index: {}]
  %s2 = inlined_call_operand.vmem [shape: bf16[8,512], index: 2, kind: input, shape index: {}]
  %s3 = inlined_call_operand.vmem [shape: bf16[8,512], index: 3, kind: input, shape index: {}]
  %s4 = inlined_call_operand.vmem [shape: bf16[128,32], index: 4, kind: input, shape index: {}]
  %s5 = inlined_call_operand.vmem [shape: f32[32,6], index: 5, kind: input, shape index: {}]
  %s6 = inlined_call_operand.hbm [shape: f32[1,512], index: 6, kind: output, shape index: {}]
  %s7 = sld [smem:[#allocation0]]
  $region57: #{tpu_custom_call.1} parent=0
    _
  %s9 = ssub.s32 1, %s7
  %s10 = scalar_select 0, %s9, %s7
  $region1: #{tpu_custom_call.1} parent=0
    #allocation2 [shape = 'u8[2048]{0}', space=vmem, size = 0x800, scoped, tag = 'output window, operand 0']
    #allocation3 [shape = 's32[2]{0}', space=sflag, size = 0x8, scoped, tag = 'scoped memory for tpu_custom_call.1']
    %11 = vsyncpa [#allocation3], 0
    %s12 = scalar_lea.sflag [#allocation3], 1
    %13 = vsyncpa %s12, 0
    loop: start=0, step=1, limit=4
    $region2: #{tpu_custom_call.1} parent=1 // loop_pre_header
      _
    $region3: #{tpu_custom_call.1} parent=1 // loop_header
      %s15 = sphi 0, %s19
      %p16 = scmp.ge.s32.totalorder %s15, 4
      %s25 = sphi 0, %s27
      %s28 = sphi 0, %s25
      %s29 = sphi 0, %s28
      %s45 = sphi 0, %s29
      %s51 = sphi 0, %s53
      %s54 = sphi 0, %s51
      %s55 = sphi 0, %s54
      %s71 = sphi 0, %s55
      %s77 = sphi 0, %s79
      %s80 = sphi 0, %s77
      %s81 = sphi 0, %s80
      %s97 = sphi 0, %s81
      %s103 = sphi 0, %s105
      %s106 = sphi 0, %s103
      %s107 = sphi 0, %s106
      %s123 = sphi 0, %s107
      %s127 = sphi 0, %s127
      %s129 = sphi 0, %s127
      %s130 = sphi 0, %s129
      %s144 = sphi 0, %s130
      %s148 = sphi 0, %s148
      %s150 = sphi 0, %s148
      %s151 = sphi 0, %s150
      %s165 = sphi 0, %s151
      %s171 = sphi 0, %s173
      %s174 = sphi 0, %s171
      %s175 = sphi 0, %s174
      %s191 = sphi 0, %s175
    $region4: #{tpu_custom_call.1} parent=1 // loop_header_branch
      %18 = sbr.rel (%p16) target = $region8
    $region5: #{tpu_custom_call.1} parent=1 // loop_body
      %s20 = ssub.s32 %s15, 1
      %s21 = ssub.s32 %s15, 2
      %s22 = sadd.s32 %s15, 1
      %s23 = ssub.s32 %s15, %s22
      %p24 = scmp.eq.s32.totalorder %s23, 0
      %s26 = sadd.s32 %s25, 1
      %s27 = scalar_select %p24, %s25, %s26
      %p30 = pneg %p24
      %p31 = scmp.eq.s32.totalorder %s15, 1
      %p32 = por %p30, %p31
      %p33 = scmp.ne.s32.totalorder %s25, %s28
      %p34 = scmp.eq.s32.totalorder %s15, 0
      %p35 = por %p33, %p34
      %p36 = scmp.ne.s32.totalorder %s25, %s28
      %p37 = scmp.eq.s32.totalorder %s20, 1
      %p38 = por %p36, %p37
      %p39 = scmp.ne.s32.totalorder %s28, %s29
      %p40 = scmp.eq.s32.totalorder %s20, 0
      %p41 = por %p39, %p40
      %p42 = scmp.ne.s32.totalorder %s28, %s29
      %p43 = scmp.eq.s32.totalorder %s21, 1
      %p44 = por %p42, %p43
      %p46 = scmp.ne.s32.totalorder %s29, %s45
      %p47 = scmp.eq.s32.totalorder %s21, 0
      %p48 = por %p46, %p47
      %s49 = ssub.s32 %s15, %s22
      %p50 = scmp.eq.s32.totalorder %s49, 0
      %s52 = sadd.s32 %s51, 1
      %s53 = scalar_select %p50, %s51, %s52
      %p56 = pneg %p50
      %p57 = scmp.eq.s32.totalorder %s15, 1
      %p58 = por %p56, %p57
      %p59 = scmp.ne.s32.totalorder %s51, %s54
      %p60 = scmp.eq.s32.totalorder %s15, 0
      %p61 = por %p59, %p60
      %p62 = scmp.ne.s32.totalorder %s51, %s54
      %p63 = scmp.eq.s32.totalorder %s20, 1
      %p64 = por %p62, %p63
      %p65 = scmp.ne.s32.totalorder %s54, %s55
      %p66 = scmp.eq.s32.totalorder %s20, 0
      %p67 = por %p65, %p66
      %p68 = scmp.ne.s32.totalorder %s54, %s55
      %p69 = scmp.eq.s32.totalorder %s21, 1
      %p70 = por %p68, %p69
      %p72 = scmp.ne.s32.totalorder %s55, %s71
      %p73 = scmp.eq.s32.totalorder %s21, 0
      %p74 = por %p72, %p73
      %s75 = ssub.s32 %s15, %s22
      %p76 = scmp.eq.s32.totalorder %s75, 0
      %s78 = sadd.s32 %s77, 1
      %s79 = scalar_select %p76, %s77, %s78
      %p82 = pneg %p76
      %p83 = scmp.eq.s32.totalorder %s15, 1
      %p84 = por %p82, %p83
      %p85 = scmp.ne.s32.totalorder %s77, %s80
      %p86 = scmp.eq.s32.totalorder %s15, 0
      %p87 = por %p85, %p86
      %p88 = scmp.ne.s32.totalorder %s77, %s80
      %p89 = scmp.eq.s32.totalorder %s20, 1
      %p90 = por %p88, %p89
      %p91 = scmp.ne.s32.totalorder %s80, %s81
      %p92 = scmp.eq.s32.totalorder %s20, 0
      %p93 = por %p91, %p92
      %p94 = scmp.ne.s32.totalorder %s80, %s81
      %p95 = scmp.eq.s32.totalorder %s21, 1
      %p96 = por %p94, %p95
      %p98 = scmp.ne.s32.totalorder %s81, %s97
      %p99 = scmp.eq.s32.totalorder %s21, 0
      %p100 = por %p98, %p99
      %s101 = ssub.s32 %s15, %s22
      %p102 = scmp.eq.s32.totalorder %s101, 0
      %s104 = sadd.s32 %s103, 1
      %s105 = scalar_select %p102, %s103, %s104
      %p108 = pneg %p102
      %p109 = scmp.eq.s32.totalorder %s15, 1
      %p110 = por %p108, %p109
      %p111 = scmp.ne.s32.totalorder %s103, %s106
      %p112 = scmp.eq.s32.totalorder %s15, 0
      %p113 = por %p111, %p112
      %p114 = scmp.ne.s32.totalorder %s103, %s106
      %p115 = scmp.eq.s32.totalorder %s20, 1
      %p116 = por %p114, %p115
      %p117 = scmp.ne.s32.totalorder %s106, %s107
      %p118 = scmp.eq.s32.totalorder %s20, 0
      %p119 = por %p117, %p118
      %p120 = scmp.ne.s32.totalorder %s106, %s107
      %p121 = scmp.eq.s32.totalorder %s21, 1
      %p122 = por %p120, %p121
      %p124 = scmp.ne.s32.totalorder %s107, %s123
      %p125 = scmp.eq.s32.totalorder %s21, 0
      %p126 = por %p124, %p125
      %s128 = sadd.s32 %s127, 1
      %p131 = scmp.eq.s32.totalorder %s15, 1
      %p132 = scmp.ne.s32.totalorder %s127, %s129
      %p133 = scmp.eq.s32.totalorder %s15, 0
      %p134 = por %p132, %p133
      %p135 = scmp.ne.s32.totalorder %s127, %s129
      %p136 = scmp.eq.s32.totalorder %s20, 1
      %p137 = por %p135, %p136
      %p138 = scmp.ne.s32.totalorder %s129, %s130
      %p139 = scmp.eq.s32.totalorder %s20, 0
      %p140 = por %p138, %p139
      %p141 = scmp.ne.s32.totalorder %s129, %s130
      %p142 = scmp.eq.s32.totalorder %s21, 1
      %p143 = por %p141, %p142
      %p145 = scmp.ne.s32.totalorder %s130, %s144
      %p146 = scmp.eq.s32.totalorder %s21, 0
      %p147 = por %p145, %p146
      %s149 = sadd.s32 %s148, 1
      %p152 = scmp.eq.s32.totalorder %s15, 1
      %p153 = scmp.ne.s32.totalorder %s148, %s150
      %p154 = scmp.eq.s32.totalorder %s15, 0
      %p155 = por %p153, %p154
      %p156 = scmp.ne.s32.totalorder %s148, %s150
      %p157 = scmp.eq.s32.totalorder %s20, 1
      %p158 = por %p156, %p157
      %p159 = scmp.ne.s32.totalorder %s150, %s151
      %p160 = scmp.eq.s32.totalorder %s20, 0
      %p161 = por %p159, %p160
      %p162 = scmp.ne.s32.totalorder %s150, %s151
      %p163 = scmp.eq.s32.totalorder %s21, 1
      %p164 = por %p162, %p163
      %p166 = scmp.ne.s32.totalorder %s151, %s165
      %p167 = scmp.eq.s32.totalorder %s21, 0
      %p168 = por %p166, %p167
      %s169 = ssub.s32 %s15, %s22
      %p170 = scmp.eq.s32.totalorder %s169, 0
      %s172 = sadd.s32 %s171, 1
      %s173 = scalar_select %p170, %s171, %s172
      %p176 = pneg %p170
      %p177 = scmp.eq.s32.totalorder %s15, 1
      %p178 = por %p176, %p177
      %p179 = scmp.ne.s32.totalorder %s171, %s174
      %p180 = scmp.eq.s32.totalorder %s15, 0
      %p181 = por %p179, %p180
      %p182 = scmp.ne.s32.totalorder %s171, %s174
      %p183 = scmp.eq.s32.totalorder %s20, 1
      %p184 = por %p182, %p183
      %p185 = scmp.ne.s32.totalorder %s174, %s175
      %p186 = scmp.eq.s32.totalorder %s20, 0
      %p187 = por %p185, %p186
      %p188 = scmp.ne.s32.totalorder %s174, %s175
      %p189 = scmp.eq.s32.totalorder %s21, 1
      %p190 = por %p188, %p189
      %p192 = scmp.ne.s32.totalorder %s175, %s191
      %p193 = scmp.eq.s32.totalorder %s21, 0
      %p194 = por %p192, %p193
      %p195 = scmp.le.s32.totalorder 1, %s15
      %p196 = scmp.lt.s32.totalorder %s15, 3
      %p197 = pnand %p195, %p196
      %p198 = pneg %p197
      // Predicated region
      $region9: #{tpu_custom_call.1} parent=5 // pred_check
        _
      $region10: #{tpu_custom_call.1} parent=5 // pred_check_branch
        %200 = sbr.rel (%p197) target = $region12
      $region11: #{tpu_custom_call.1} parent=5 // pred_region
        %s201 = ssub.s32 %s15, 1
        // Predicated region
        $region13: #{tpu_custom_call.1} parent=11 // pred_check
          %p202 = pneg %p140
        $region14: #{tpu_custom_call.1} parent=11 // pred_check_branch
          %204 = sbr.rel (%p202) target = $region16
        $region15: #{tpu_custom_call.1} parent=11 // pred_region
          _
        $region16: #{tpu_custom_call.1} parent=11 // pred_fallthru
          _
        // Predicated region
        $region17: #{tpu_custom_call.1} parent=11 // pred_check
          %p205 = pneg %p161
        $region18: #{tpu_custom_call.1} parent=11 // pred_check_branch
          %207 = sbr.rel (%p205) target = $region20
        $region19: #{tpu_custom_call.1} parent=11 // pred_region
          _
        $region20: #{tpu_custom_call.1} parent=11 // pred_fallthru
          _
      $region12: #{tpu_custom_call.1} parent=5 // pred_fallthru
        _
      %p208 = scmp.lt.s32.totalorder %s15, 2
      // Predicated region
      $region21: #{tpu_custom_call.1} parent=5 // pred_check
        %p209 = pneg %p208
      $region22: #{tpu_custom_call.1} parent=5 // pred_check_branch
        %211 = sbr.rel (%p209) target = $region24
      $region23: #{tpu_custom_call.1} parent=5 // pred_region
        // Predicated region
        $region25: #{tpu_custom_call.1} parent=23 // pred_check
          %p212 = pneg %p35
        $region26: #{tpu_custom_call.1} parent=23 // pred_check_branch
          %214 = sbr.rel (%p212) target = $region28
        $region27: #{tpu_custom_call.1} parent=23 // pred_region
          %s215 = smul.u32 2, %s15
          %p216 = scmp.lt.s32.totalorder %s215, 3
          %s217 = scalar_select %p216, %s215, 3
          %s218 = smul.addr %s217, 8
          %s219 = scalar_lea.vmem %s0, %s218
          %s220 = smul.u32 2, %s15
        $region28: #{tpu_custom_call.1} parent=23 // pred_fallthru
          _
        // Predicated region
        $region29: #{tpu_custom_call.1} parent=23 // pred_check
          %p221 = pneg %p61
        $region30: #{tpu_custom_call.1} parent=23 // pred_check_branch
          %223 = sbr.rel (%p221) target = $region32
        $region31: #{tpu_custom_call.1} parent=23 // pred_region
          %s224 = smul.u32 2, %s15
          %p225 = scmp.lt.s32.totalorder %s224, 3
          %s226 = scalar_select %p225, %s224, 3
          %s227 = smul.addr %s226, 8
          %s228 = scalar_lea.vmem %s1, %s227
          %s229 = smul.u32 2, %s15
        $region32: #{tpu_custom_call.1} parent=23 // pred_fallthru
          _
        // Predicated region
        $region33: #{tpu_custom_call.1} parent=23 // pred_check
          %p230 = pneg %p87
        $region34: #{tpu_custom_call.1} parent=23 // pred_check_branch
          %232 = sbr.rel (%p230) target = $region36
        $region35: #{tpu_custom_call.1} parent=23 // pred_region
          %s233 = smul.u32 2, %s15
          %p234 = scmp.lt.s32.totalorder %s233, 3
          %s235 = scalar_select %p234, %s233, 3
          %s236 = smul.addr %s235, 4
          %s237 = scalar_lea.vmem %s2, %s236
          %s238 = smul.u32 2, %s15
        $region36: #{tpu_custom_call.1} parent=23 // pred_fallthru
          _
        // Predicated region
        $region37: #{tpu_custom_call.1} parent=23 // pred_check
          %p239 = pneg %p113
        $region38: #{tpu_custom_call.1} parent=23 // pred_check_branch
          %241 = sbr.rel (%p239) target = $region40
        $region39: #{tpu_custom_call.1} parent=23 // pred_region
          %s242 = smul.u32 2, %s15
          %p243 = scmp.lt.s32.totalorder %s242, 3
          %s244 = scalar_select %p243, %s242, 3
          %s245 = smul.addr %s244, 4
          %s246 = scalar_lea.vmem %s3, %s245
          %s247 = smul.u32 2, %s15
        $region40: #{tpu_custom_call.1} parent=23 // pred_fallthru
          _
      $region24: #{tpu_custom_call.1} parent=5 // pred_fallthru
        _
      %p248 = scmp.le.s32.totalorder 1, %s15
      %p249 = scmp.lt.s32.totalorder %s15, 3
      %p250 = pnand %p248, %p249
      %p251 = pneg %p250
      // Predicated region
      $region41: #{tpu_custom_call.1} parent=5 // pred_check
        _
      $region42: #{tpu_custom_call.1} parent=5 // pred_check_branch
        %253 = sbr.rel (%p250) target = $region44
      $region43: #{tpu_custom_call.1} parent=5 // pred_region
        %s254 = ssub.s32 %s15, 1
        %s255 = smul.u32 2, %s20
        %p256 = scmp.lt.s32.totalorder %s255, 3
        %s257 = scalar_select %p256, %s255, 3
        %s258 = smul.addr %s257, 8
        %s259 = scalar_lea.vmem %s0, %s258
        %p260 = pneg %p41
        %p261 = pneg %p38
        %s262 = smul.u32 2, %s20
        %p263 = scmp.lt.s32.totalorder %s262, 3
        %s264 = scalar_select %p263, %s262, 3
        %s265 = smul.addr %s264, 8
        %s266 = scalar_lea.vmem %s1, %s265
        %p267 = pneg %p67
        %p268 = pneg %p64
        %s269 = smul.u32 2, %s20
        %p270 = scmp.lt.s32.totalorder %s269, 3
        %s271 = scalar_select %p270, %s269, 3
        %s272 = smul.addr %s271, 4
        %s273 = scalar_lea.vmem %s2, %s272
        %p274 = pneg %p93
        %p275 = pneg %p90
        %s276 = smul.u32 2, %s20
        %p277 = scmp.lt.s32.totalorder %s276, 3
        %s278 = scalar_select %p277, %s276, 3
        %s279 = smul.addr %s278, 4
        %s280 = scalar_lea.vmem %s3, %s279
        %p281 = pneg %p119
        %p282 = pneg %p116
        %p283 = pneg %p140
        %p284 = pneg %p137
        %p285 = pneg %p161
        %p286 = pneg %p158
        %p287 = pneg %p187
        %p288 = pneg %p184
        %s289 = sand.u32 %s174, 1
        %s290 = scalar_lea.sflag [#allocation3], %s289
        %s291 = sand.u32 %s174, 1
        %s292 = smul.addr %s291, 2
        %s293 = scalar_lea.vmem [#allocation2], %s292
        %s294 = smul.u32 2, %s20
        %p295 = scmp.lt.s32.totalorder %s294, 3
        %s296 = scalar_select %p295, %s294, 3
        %s297 = smul.addr %s296, 8
        %s298 = scalar_lea.vmem %s0, %s297
        %s299 = smul.u32 2, %s20
        %s300 = smul.u32 2, %s20
        %p301 = scmp.lt.s32.totalorder %s300, 3
        %s302 = scalar_select %p301, %s300, 3
        %s303 = smul.addr %s302, 8
        %s304 = scalar_lea.vmem %s1, %s303
        %s305 = smul.u32 2, %s20
        %s306 = smul.u32 2, %s20
        %p307 = scmp.lt.s32.totalorder %s306, 3
        %s308 = scalar_select %p307, %s306, 3
        %s309 = smul.addr %s308, 4
        %s310 = scalar_lea.vmem %s2, %s309
        %s311 = smul.u32 2, %s20
        %s312 = smul.u32 2, %s20
        %p313 = scmp.lt.s32.totalorder %s312, 3
        %s314 = scalar_select %p313, %s312, 3
        %s315 = smul.addr %s314, 4
        %s316 = scalar_lea.vmem %s3, %s315
        %s317 = smul.u32 2, %s20
        %s318 = smul.u32 2, %s20
        %v320 = vld [vmem:[%s4] sm:$0xf]
        %v321 = vld [vmem:[%s4 + $0x4] sm:$0xf]
        %v322 = vld [vmem:[%s4 + $0x8] sm:$0xf]
        %v323 = vld [vmem:[%s4 + $0xc] sm:$0xf]
        %v324 = vld [vmem:[%s4 + $0x10] sm:$0xf]
        %v325 = vld [vmem:[%s4 + $0x14] sm:$0xf]
        %v326 = vld [vmem:[%s4 + $0x18] sm:$0xf]
        %v327 = vld [vmem:[%s4 + $0x1c] sm:$0xf]
        %v328 = vld [vmem:[%s4 + $0x20] sm:$0xf]
        %v329 = vld [vmem:[%s4 + $0x24] sm:$0xf]
        %v330 = vld [vmem:[%s4 + $0x30] sm:$0xf]
        %v331 = vld [vmem:[%s5] sm:$0xff]
        %v332 = vld [vmem:[%s5 + $0x8] sm:$0xff]
        %v333 = vld [vmem:[%s5 + $0x10] sm:$0xff]
        %v334 = vld [vmem:[%s5 + $0x18] sm:$0xff]
        %v335 = vld [vmem:[%s298] sm:$0xff]
        %v336 = vld [vmem:[%s298 + $0x8] sm:$0xff]
        %v337 = vld [vmem:[%s304] sm:$0xff]
        %v338 = vld [vmem:[%s304 + $0x8] sm:$0xff]
        %v339 = vmul.f32 %v335, %v337
        %v340 = vmul.f32 %v336, %v338
        %v341 = vld [vmem:[%s310] sm:$0xff]
        %v342 = vld [vmem:[%s316] sm:$0xff]
        %v347 = vunpack.c.l.b16 %v324
        %v348 = vunpack.c.l.b16 %v325
        %v349 = vunpack.c.l.b16 %v326
        %v350 = vunpack.c.l.b16 %v327
        %v351 = vpack.c.b16 %v348, %v347
        %v352 = vpack.c.b16 %v350, %v349
        %v354 = vunpack.c.l.b16 %v342
        %v355 = vunpack.c.h.b16 %v342
        %v356 = vpack.c.b16 %v354, %v354
        %v357 = vpack.c.b16 %v355, %v355
        %vm358 = vcmask 64512
        %v360 = vsel %vm358, %v351, 0
        %v363 = vsel %vm358, %v352, 0
        %vm365 = vcmask 1043456
        %v367 = vsel %vm365, %v356, 0
        %v370 = vsel %vm365, %v357, 0
        %372 = vmatprep.subr.bf16.mxu0 %v370
        %373 = vmatpush1.bf16.msra.mxu0 %v367
        %374 = vmatprep.subr.bf16.mxu0 0
        %375 = vmatpush1.bf16.msra.mxu0 0
        %376 = vmatprep.subr.bf16.mxu0 0
        %377 = vmatpush1.bf16.msra.mxu0 0
        %378 = vmatprep.subr.bf16.mxu0 0
        %379 = vmatpush1.bf16.msra.mxu0 0
        %380 = vmatprep.subr.bf16.mxu0 0
        %381 = vmatpush1.bf16.msra.mxu0 0
        %382 = vmatprep.subr.bf16.mxu0 0
        %383 = vmatpush1.bf16.msra.mxu0 0
        %384 = vmatprep.subr.bf16.mxu0 0
        %385 = vmatpush1.bf16.msra.mxu0 0
        %386 = vmatprep.subr.bf16.mxu0 0
        %387 = vmatpush1.bf16.msra.mxu0 0
        %388 = vmatprep.subr.bf16.mxu0 0
        %389 = vmatpush1.bf16.msra.mxu0 0
        %390 = vmatprep.subr.bf16.mxu0 0
        %391 = vmatpush1.bf16.msra.mxu0 0
        %392 = vmatprep.subr.bf16.mxu0 0
        %393 = vmatpush1.bf16.msra.mxu0 0
        %394 = vmatprep.subr.bf16.mxu0 0
        %395 = vmatpush1.bf16.msra.mxu0 0
        %396 = vmatprep.subr.bf16.mxu0 0
        %397 = vmatpush1.bf16.msra.mxu0 0
        %398 = vmatprep.subr.bf16.mxu0 0
        %399 = vmatpush1.bf16.msra.mxu0 0
        %400 = vmatprep.subr.bf16.mxu0 0
        %401 = vmatpush1.bf16.msra.mxu0 0
        %402 = vmatprep.subr.bf16.mxu0 0
        %403 = vmatpush1.bf16.msra.mxu0 0
        %404 = vmatprep.mubr.bf16.mxu0 0
        %405 = vmatmul.mubr.bf16.gmra.mrb[0].mxu0 %v360
        %v406 = vpop.f32.mrb[0].mxu0
        %v407 = vadd.f32 0.0, %v406
        %v408 = vpop.f32.mrb[0].mxu0
        %v409 = vadd.f32 0.0, %v408
        %v410 = vpop.f32.mrb[0].mxu0
        %v411 = vadd.f32 0.0, %v410
        %v412 = vpop.f32.mrb[0].mxu0
        %v413 = vadd.f32 0.0, %v412
        %414 = vmatprep.mubr.bf16.mxu0 0
        %415 = vmatmul.mubr.bf16.gmra.mrb[0].mxu0 %v363
        %v416 = vpop.f32.mrb[0].mxu0
        %v417 = vadd.f32 0.0, %v416
        %v418 = vpop.f32.mrb[0].mxu0
        %v419 = vadd.f32 0.0, %v418
        %v420 = vpop.f32.mrb[0].mxu0
        %v421 = vadd.f32 0.0, %v420
        %v422 = vpop.f32.mrb[0].mxu0
        %v423 = vadd.f32 0.0, %v422
        %424 = vdwg.mxu0
        %v429 = vunpack.c.l.b16 %v320
        %v430 = vunpack.c.l.b16 %v321
        %v431 = vunpack.c.l.b16 %v322
        %v432 = vunpack.c.l.b16 %v323
        %v433 = vpack.c.b16 %v430, %v429
        %v434 = vpack.c.b16 %v432, %v431
        %v436 = vunpack.c.l.b16 %v341
        %v437 = vunpack.c.h.b16 %v341
        %v438 = vpack.c.b16 %v436, %v436
        %v439 = vpack.c.b16 %v437, %v437
        %v441 = vsel %vm358, %v433, 0
        %v444 = vsel %vm358, %v434, 0
        %v447 = vsel %vm365, %v438, 0
        %v450 = vsel %vm365, %v439, 0
        %452 = vmatprep.subr.bf16.mxu0 %v450
        %453 = vmatpush1.bf16.msra.mxu0 %v447
        %454 = vmatprep.subr.bf16.mxu0 0
        %455 = vmatpush1.bf16.msra.mxu0 0
        %456 = vmatprep.subr.bf16.mxu0 0
        %457 = vmatpush1.bf16.msra.mxu0 0
        %458 = vmatprep.subr.bf16.mxu0 0
        %459 = vmatpush1.bf16.msra.mxu0 0
        %460 = vmatprep.subr.bf16.mxu0 0
        %461 = vmatpush1.bf16.msra.mxu0 0
        %462 = vmatprep.subr.bf16.mxu0 0
        %463 = vmatpush1.bf16.msra.mxu0 0
        %464 = vmatprep.subr.bf16.mxu0 0
        %465 = vmatpush1.bf16.msra.mxu0 0
        %466 = vmatprep.subr.bf16.mxu0 0
        %467 = vmatpush1.bf16.msra.mxu0 0
        %468 = vmatprep.subr.bf16.mxu0 0
        %469 = vmatpush1.bf16.msra.mxu0 0
        %470 = vmatprep.subr.bf16.mxu0 0
        %471 = vmatpush1.bf16.msra.mxu0 0
        %472 = vmatprep.subr.bf16.mxu0 0
        %473 = vmatpush1.bf16.msra.mxu0 0
        %474 = vmatprep.subr.bf16.mxu0 0
        %475 = vmatpush1.bf16.msra.mxu0 0
        %476 = vmatprep.subr.bf16.mxu0 0
        %477 = vmatpush1.bf16.msra.mxu0 0
        %478 = vmatprep.subr.bf16.mxu0 0
        %479 = vmatpush1.bf16.msra.mxu0 0
        %480 = vmatprep.subr.bf16.mxu0 0
        %481 = vmatpush1.bf16.msra.mxu0 0
        %482 = vmatprep.subr.bf16.mxu0 0
        %483 = vmatpush1.bf16.msra.mxu0 0
        %484 = vmatprep.mubr.bf16.mxu0 0
        %485 = vmatmul.mubr.bf16.gmra.mrb[0].mxu0 %v441
        %v486 = vpop.f32.mrb[0].mxu0
        %v487 = vadd.f32 %v407, %v486
        %v488 = vpop.f32.mrb[0].mxu0
        %v489 = vadd.f32 %v409, %v488
        %v490 = vpop.f32.mrb[0].mxu0
        %v491 = vadd.f32 %v411, %v490
        %v492 = vpop.f32.mrb[0].mxu0
        %v493 = vadd.f32 %v413, %v492
        %494 = vmatprep.mubr.bf16.mxu0 0
        %495 = vmatmul.mubr.bf16.gmra.mrb[0].mxu0 %v444
        %v496 = vpop.f32.mrb[0].mxu0
        %v497 = vadd.f32 %v417, %v496
        %v498 = vpop.f32.mrb[0].mxu0
        %v499 = vadd.f32 %v419, %v498
        %v500 = vpop.f32.mrb[0].mxu0
        %v501 = vadd.f32 %v421, %v500
        %v502 = vpop.f32.mrb[0].mxu0
        %v503 = vadd.f32 %v423, %v502
        %504 = vdwg.mxu0
        %506 = vset.pattern.permute.xlu0 0
        %507 = vperm.xlu0 %506, %v331
        %v508 = vpop.permute.xlu0 %507
        %511 = vset.pattern.permute.xlu0 0
        %512 = vperm.xlu0 %511, %v332
        %v513 = vpop.permute.xlu0 %512
        %516 = vset.pattern.permute.xlu0 0
        %517 = vperm.xlu0 %516, %v333
        %v518 = vpop.permute.xlu0 %517
        %521 = vset.pattern.permute.xlu0 0
        %522 = vperm.xlu0 %521, %v334
        %v523 = vpop.permute.xlu0 %522
        %v525 = vadd.f32 %v487, %v508
        %v526 = vadd.f32 %v489, %v508
        %v527 = vadd.f32 %v491, %v513
        %v528 = vadd.f32 %v493, %v513
        %v529 = vadd.f32 %v497, %v518
        %v530 = vadd.f32 %v499, %v518
        %v531 = vadd.f32 %v501, %v523
        %v532 = vadd.f32 %v503, %v523
        %v533 = vmax.f32 %v525, 0.0
        %v534 = vmax.f32 %v526, 0.0
        %v535 = vmax.f32 %v527, 0.0
        %v536 = vmax.f32 %v528, 0.0
        %v537 = vmax.f32 %v529, 0.0
        %v538 = vmax.f32 %v530, 0.0
        %v539 = vmax.f32 %v531, 0.0
        %v540 = vmax.f32 %v532, 0.0
        %v541 = vpack.c.bf16 %v535, %v533
        %v542 = vpack.c.bf16 %v536, %v534
        %v543 = vpack.c.bf16 %v539, %v537
        %v544 = vpack.c.bf16 %v540, %v538
        %545 = vset.pattern.permute.xlu0 1
        %546 = vperm.xlu0 %545, %v331
        %v547 = vpop.permute.xlu0 %546
        %549 = vset.pattern.permute.xlu0 1
        %550 = vperm.xlu0 %549, %v332
        %v551 = vpop.permute.xlu0 %550
        %v555 = vunpack.c.l.b16 %v328
        %v556 = vunpack.c.l.b16 %v329
        %v557 = vpack.c.b16 %v556, %v555
        %vm558 = vcmask 261120
        %v560 = vsel %vm558, %v557, 0
        %562 = vmatprep.subr.bf16.mxu0 %v542
        %563 = vmatpush1.bf16.msra.mxu0 %v541
        %564 = vmatprep.subr.bf16.mxu0 %v544
        %565 = vmatpush1.bf16.msra.mxu0 %v543
        %566 = vmatprep.subr.bf16.mxu0 0
        %567 = vmatpush1.bf16.msra.mxu0 0
        %568 = vmatprep.subr.bf16.mxu0 0
        %569 = vmatpush1.bf16.msra.mxu0 0
        %570 = vmatprep.subr.bf16.mxu0 0
        %571 = vmatpush1.bf16.msra.mxu0 0
        %572 = vmatprep.subr.bf16.mxu0 0
        %573 = vmatpush1.bf16.msra.mxu0 0
        %574 = vmatprep.subr.bf16.mxu0 0
        %575 = vmatpush1.bf16.msra.mxu0 0
        %576 = vmatprep.subr.bf16.mxu0 0
        %577 = vmatpush1.bf16.msra.mxu0 0
        %578 = vmatprep.subr.bf16.mxu0 0
        %579 = vmatpush1.bf16.msra.mxu0 0
        %580 = vmatprep.subr.bf16.mxu0 0
        %581 = vmatpush1.bf16.msra.mxu0 0
        %582 = vmatprep.subr.bf16.mxu0 0
        %583 = vmatpush1.bf16.msra.mxu0 0
        %584 = vmatprep.subr.bf16.mxu0 0
        %585 = vmatpush1.bf16.msra.mxu0 0
        %586 = vmatprep.subr.bf16.mxu0 0
        %587 = vmatpush1.bf16.msra.mxu0 0
        %588 = vmatprep.subr.bf16.mxu0 0
        %589 = vmatpush1.bf16.msra.mxu0 0
        %590 = vmatprep.subr.bf16.mxu0 0
        %591 = vmatpush1.bf16.msra.mxu0 0
        %592 = vmatprep.subr.bf16.mxu0 0
        %593 = vmatpush1.bf16.msra.mxu0 0
        %594 = vmatprep.mubr.bf16.mxu0 0
        %595 = vmatmul.mubr.bf16.gmra.mrb[0].mxu0 %v560
        %v596 = vpop.f32.mrb[0].mxu0
        %v597 = vadd.f32 %v547, %v596
        %v598 = vpop.f32.mrb[0].mxu0
        %v599 = vadd.f32 %v547, %v598
        %v600 = vpop.f32.mrb[0].mxu0
        %v601 = vadd.f32 %v551, %v600
        %v602 = vpop.f32.mrb[0].mxu0
        %v603 = vadd.f32 %v551, %v602
        %604 = vdwg.mxu0
        %v605 = vmax.f32 %v597, 0.0
        %v606 = vmax.f32 %v599, 0.0
        %v607 = vmax.f32 %v601, 0.0
        %v608 = vmax.f32 %v603, 0.0
        %v609 = vpack.c.bf16 %v607, %v605
        %v610 = vpack.c.bf16 %v608, %v606
        %611 = vset.pattern.permute.xlu0 2
        %612 = vperm.xlu0 %611, %v331
        %v613 = vpop.permute.xlu0 %612
        %vm615 = vcmask 130048
        %v617 = vsel %vm615, %v330, 0
        %619 = vmatprep.subr.bf16.mxu0 %v610
        %620 = vmatpush1.bf16.msra.mxu0 %v609
        %621 = vmatprep.subr.bf16.mxu0 0
        %622 = vmatpush1.bf16.msra.mxu0 0
        %623 = vmatprep.subr.bf16.mxu0 0
        %624 = vmatpush1.bf16.msra.mxu0 0
        %625 = vmatprep.subr.bf16.mxu0 0
        %626 = vmatpush1.bf16.msra.mxu0 0
        %627 = vmatprep.subr.bf16.mxu0 0
        %628 = vmatpush1.bf16.msra.mxu0 0
        %629 = vmatprep.subr.bf16.mxu0 0
        %630 = vmatpush1.bf16.msra.mxu0 0
        %631 = vmatprep.subr.bf16.mxu0 0
        %632 = vmatpush1.bf16.msra.mxu0 0
        %633 = vmatprep.subr.bf16.mxu0 0
        %634 = vmatpush1.bf16.msra.mxu0 0
        %635 = vmatprep.subr.bf16.mxu0 0
        %636 = vmatpush1.bf16.msra.mxu0 0
        %637 = vmatprep.subr.bf16.mxu0 0
        %638 = vmatpush1.bf16.msra.mxu0 0
        %639 = vmatprep.subr.bf16.mxu0 0
        %640 = vmatpush1.bf16.msra.mxu0 0
        %641 = vmatprep.subr.bf16.mxu0 0
        %642 = vmatpush1.bf16.msra.mxu0 0
        %643 = vmatprep.subr.bf16.mxu0 0
        %644 = vmatpush1.bf16.msra.mxu0 0
        %645 = vmatprep.subr.bf16.mxu0 0
        %646 = vmatpush1.bf16.msra.mxu0 0
        %647 = vmatprep.subr.bf16.mxu0 0
        %648 = vmatpush1.bf16.msra.mxu0 0
        %649 = vmatprep.subr.bf16.mxu0 0
        %650 = vmatpush1.bf16.msra.mxu0 0
        %651 = vmatprep.mubr.bf16.mxu0 0
        %652 = vmatmul.mubr.bf16.gmra.mrb[0].mxu0 %v617
        %v653 = vpop.f32.mrb[0].mxu0
        %v654 = vadd.f32 %v613, %v653
        %v655 = vpop.f32.mrb[0].mxu0
        %v656 = vadd.f32 %v613, %v655
        %v657 = vpop.f32.mrb[0].mxu0
        %v658 = vpop.f32.mrb[0].mxu0
        %659 = vdwg.mxu0
        %v660 = vmax.f32 %v654, 0.0
        %v661 = vmax.f32 %v656, 0.0
        %662 = vset.pattern.permute.xlu0 4
        %663 = vperm.xlu0 %662, %v331
        %v664 = vpop.permute.xlu0 %663
        %v666 = vmul.f32 %v339, %v664
        %v667 = vmul.f32 %v340, %v664
        %v668 = vrot.slane %v666, 4
        %v669 = vadd.f32 %v666, %v668
        %v670 = vrot.slane %v669, 2
        %v671 = vadd.f32 %v669, %v670
        %v672 = vrot.slane %v671, 1
        %v673 = vadd.f32 %v671, %v672
        %v674 = vrot.slane %v667, 4
        %v675 = vadd.f32 %v667, %v674
        %v676 = vrot.slane %v675, 2
        %v677 = vadd.f32 %v675, %v676
        %v678 = vrot.slane %v677, 1
        %v679 = vadd.f32 %v677, %v678
        %680 = vset.pattern.permute.xlu0 3
        %681 = vperm.xlu0 %680, %v331
        %v682 = vpop.permute.xlu0 %681
        %v684 = vmul.f32 %v660, %v682
        %v685 = vmul.f32 %v661, %v682
        %v686 = vrot.slane %v684, 4
        %v687 = vadd.f32 %v684, %v686
        %v688 = vrot.slane %v687, 2
        %v689 = vadd.f32 %v687, %v688
        %v690 = vrot.slane %v689, 1
        %v691 = vadd.f32 %v689, %v690
        %v692 = vrot.slane %v685, 4
        %v693 = vadd.f32 %v685, %v692
        %v694 = vrot.slane %v693, 2
        %v695 = vadd.f32 %v693, %v694
        %v696 = vrot.slane %v695, 1
        %v697 = vadd.f32 %v695, %v696
        %v698 = vadd.f32 %v673, %v691
        %v699 = vadd.f32 %v679, %v697
        %700 = vset.pattern.permute.xlu0 5
        %701 = vperm.xlu0 %700, %v331
        %v702 = vpop.permute.xlu0 %701
        %v704 = vadd.f32 %v698, %v702
        %v705 = vadd.f32 %v699, %v702
        %v706 = vxor.u32 %v704, 2147483648
        %v707 = vxor.u32 %v705, 2147483648
        %v708 = vmul.f32 %v706, 1.442695
        %v709 = vpow.pop %v708
        %v710 = vmul.f32 %v707, 1.442695
        %v711 = vpow.pop %v710
        %v712 = vadd.f32 %v709, 1.0
        %v713 = vadd.f32 %v711, 1.0
        %v714 = vrcp.pop %v712
        %v715 = vmul.f32 1.0, %v714
        %v716 = vrcp.pop %v713
        %v717 = vmul.f32 1.0, %v716
        %v720 = vcombine.low %v715, %v717
        %v722 = vunpack.c.l.s4 1966171168
        %v723 = vunpack.c.0.s8 %v722
        %v724 = vlaneseq
        %v725 = vshrl.u32 %v724, 7
        %v726 = vsub.s32 %v723, %v725
        %v727 = vrot.slane %v720, %v726
        %v729 = vunpack.c.l.s4 1966171168
        %v730 = vunpack.c.0.s8 %v729
        %v731 = vlaneseq
        %v732 = vshrl.u32 %v731, 7
        %v733 = vsub.s32 %v730, %v732
        %v734 = vrot.slane %v727, %v733
        %v736 = vlaneseq
        %vm737 = vcmp.ge.s32.totalorder %v736, 0
        %vm738 = vcmp.lt.s32.totalorder %v736, 256
        %vm739 = vmand %vm737, %vm738
        %740 = vst.msk [vmem:[%s293] sm:$0x3] %vm739, %v734
        %s741 = sand.u32 %s174, 1
        %s742 = scalar_lea.sflag [#allocation3], %s741
        %s743 = sand.u32 %s174, 1
        %s744 = smul.addr %s743, 2
        %s745 = scalar_lea.vmem [#allocation2], %s744
        // Predicated region
        $region45: #{tpu_custom_call.1} parent=43 // pred_check
          %p746 = pneg %p184
        $region46: #{tpu_custom_call.1} parent=43 // pred_check_branch
          %748 = sbr.rel (%p746) target = $region48
        $region47: #{tpu_custom_call.1} parent=43 // pred_region
          %s749 = smul.u32 2, %s20
          %s751 = ssub.s32 32, 32
          %752 = vsyncadd %s742, %s751
          %s753 = smul.addr %s749, 16
          %s754 = scalar_lea.hbm %s6, %s753
          %s756 = sshll.u32 %s745, 4
          %s757 = int_to_ptr.vmem [resolvable:$true] %s756
          %759 = dma.vmem_to_hbm [thread:$0]  %s757, 32, %s754, %s742
        $region48: #{tpu_custom_call.1} parent=43 // pred_fallthru
          _
      $region44: #{tpu_custom_call.1} parent=5 // pred_fallthru
        _
      %p760 = scmp.le.s32.totalorder 2, %s15
      // Predicated region
      $region49: #{tpu_custom_call.1} parent=5 // pred_check
        %p761 = pneg %p760
      $region50: #{tpu_custom_call.1} parent=5 // pred_check_branch
        %763 = sbr.rel (%p761) target = $region52
      $region51: #{tpu_custom_call.1} parent=5 // pred_region
        %s764 = ssub.s32 %s15, 2
        // Predicated region
        $region53: #{tpu_custom_call.1} parent=51 // pred_check
          %p765 = pneg %p190
        $region54: #{tpu_custom_call.1} parent=51 // pred_check_branch
          %767 = sbr.rel (%p765) target = $region56
        $region55: #{tpu_custom_call.1} parent=51 // pred_region
          %s768 = sand.u32 %s175, 1
          %s769 = scalar_lea.sflag [#allocation3], %s768
          %s770 = sand.u32 %s175, 1
          %s771 = smul.addr %s770, 2
          %s772 = scalar_lea.vmem [#allocation2], %s771
          %773 = dma.done %s769, 32
        $region56: #{tpu_custom_call.1} parent=51 // pred_fallthru
          _
      $region52: #{tpu_custom_call.1} parent=5 // pred_fallthru
        _
    $region6: #{tpu_custom_call.1} parent=1 // loop_footer
      %s19 = sadd.s32 1, %s15
    $region7: #{tpu_custom_call.1} parent=1 // loop_footer_branch
      %14 = sbr.rel target = $region3
    $region8: #{tpu_custom_call.1} parent=1 // loop_exit
      _
    %774 = vsyncpa [#allocation3], 1
    %s775 = scalar_lea.sflag [#allocation3], 1
    %776 = vsyncpa %s775, 1

</llo_original>
